<compile_context>
chip_gen: v5e
topology: v5e:2x2
jax: 0.10.0
libtpu: 0.0.40
codegen_flags: <defaults>
</compile_context>

<pallas_src>
import jax
import jax.numpy as jnp
from jax import lax
from jax.experimental import pallas as pl
from jax.experimental.pallas import tpu as pltpu

LANES = 128           # vreg lane width -> last dim of the packed input
SUBLANES = 8          # f32 sublane granularity
ROW_ALIGN = 16        # row-tile alignment (multiple of 16 covers bf16 packing)
NUM_CORE_SPLITS = 2   # leading "parallel" axis (2 TCs on v7x; no-op on v5e/v6e)


def _round_up(n, m):
    return ((n + m - 1) // m) * m


def _cdiv(a, b):
    return -(-a // b)


def _make_kernel(tr, rows, npc, needs_mask):
    """Kernel factory; all tiling parameters are static Python ints."""

    def kernel(x_ref, o_ref):
        c = pl.program_id(0)   # core-split index ("parallel")
        j = pl.program_id(1)   # reduction step   ("arbitrary")

        @pl.when(j == 0)
        def _init():
            o_ref[...] = jnp.zeros_like(o_ref)

        # Stream in native dtype; upcast on the VPU (hidden under the DMA).
        x = x_ref[...].astype(jnp.float32)                      # (tr, 128)

        if needs_mask:
            # Neutralize rows past the logical end (partial last block and/or
            # the clamped duplicate block of an odd split): 1 * log(1) == 0.
            blk = c * npc + j
            ridx = blk * tr + lax.broadcasted_iota(jnp.int32, (tr, LANES), 0)
            x = jnp.where(ridx < rows, x, 1.0)

        v = x * jnp.log(x)                                       # EUP + VPU

        # Full-vreg accumulation: collapse (tr,128) -> (8,128) with pure VPU
        # adds; the cross-sublane/lane reduction is deferred to the wrapper.
        partial = jnp.sum(v.reshape(tr // SUBLANES, SUBLANES, LANES), axis=0)
        o_ref[...] += partial[None, :, :]

    return kernel


def conditional_entropy_loss(x, *, tile_rows=4096):
    """-sum(x * log(x)) over all elements of x (any shape); returns a scalar."""
    dtype = x.dtype
    x_flat = jnp.ravel(x)                 # NO dtype cast: stream native dtype
    n = x_flat.size

    rows = _cdiv(n, LANES) if n else 1
    if rows * LANES != n:
        # Reshape to (rows, 128) requires n % 128 == 0; append a minimal ones
        # pad (exactly neutral for the sum).  Padding up to a 16-row boundary
        # costs <= 2047 extra elements and keeps the small/ragged case off the
        # partial-block path.
        # TODO(synk): a truly zero-copy ragged path would pass the flat array
        # with memory_space=pl.ANY and drive the DMA manually.
        rows = _round_up(rows, ROW_ALIGN)
        pad = rows * LANES - n
        x_flat = jnp.concatenate([x_flat, jnp.ones((pad,), dtype)])
    x2d = x_flat.reshape(rows, LANES)     # zero-copy when n % 128 == 0

    # Row tile: large (4096 rows = 2 MiB f32 / 1 MiB bf16 per block, double
    # buffered -> under the 16 MiB v5e scoped-VMEM default) and a multiple of
    # 16 so bf16 sublane packing stays unmasked.
    tr = _round_up(min(tile_rows, _round_up(rows, ROW_ALIGN)), ROW_ALIGN)

    nb = _cdiv(rows, tr)                   # total row-blocks
    npc = _cdiv(nb, NUM_CORE_SPLITS)       # row-blocks per core-split
    last_blk = nb - 1
    # Mask only when the 2-way split over-covers the true row count
    # (partial last block and/or odd block count); decided statically.
    needs_mask = (NUM_CORE_SPLITS * npc * tr != rows)

    out = pl.pallas_call(
        _make_kernel(tr, rows, npc, needs_mask),
        out_shape=jax.ShapeDtypeStruct(
            (NUM_CORE_SPLITS, SUBLANES, LANES), jnp.float32),
        grid_spec=pltpu.PrefetchScalarGridSpec(
            num_scalar_prefetch=0,
            grid=(NUM_CORE_SPLITS, npc),
            in_specs=[pl.BlockSpec(
                (tr, LANES),
                # Clamp so every fetched block starts in-bounds; the clamped
                # duplicate (odd nb) is fully neutralized by the row mask.
                lambda c, j: (jnp.minimum(c * npc + j, last_blk), 0))],
            out_specs=pl.BlockSpec((1, SUBLANES, LANES),
                                   lambda c, j: (c, 0, 0)),
        ),
        compiler_params=pltpu.CompilerParams(
            dimension_semantics=("parallel", "arbitrary")),
    )(x2d)

    # Tiny (2, 8, 128) cross-lane reduction + negation in the wrapper.
    return (-jnp.sum(out)).astype(dtype)


def reference(x):
    """Plain-JAX reference mirroring the PyTorch forward."""
    return -jnp.sum(x * jnp.log(x))


if __name__ == "__main__":
    key = jax.random.PRNGKey(0)
    k1, k2, k3 = jax.random.split(key, 3)

    # ConditionalEntropyLoss consumes a probability tensor (softmax output).
    # 1) batch=8 x 100 classes: n % 128 != 0 -> minimal ones-pad path plus the
    #    fully-masked clamped block on the second core-split.
    x1 = jax.nn.softmax(jax.random.normal(k1, (8, 100), jnp.float32), axis=-1)
    # 2) 24 x 64: n % 128 == 0 but rows not a tile multiple -> zero-copy
    #    reshape + in-kernel partial-block row mask.
    x2 = jax.nn.softmax(jax.random.normal(k2, (24, 64), jnp.float32), axis=-1)
    # 3) 64 x 256 with a small tile override -> grid=(2, 4): multi-step
    #    accumulation with both core-splits doing real (unmasked) work.
    x3 = jax.nn.softmax(jax.random.normal(k3, (64, 256), jnp.float32), axis=-1)

    for x, tr in ((x1, 4096), (x2, 4096), (x3, 16)):
        out = jax.block_until_ready(conditional_entropy_loss(x, tile_rows=tr))
        ref = reference(x)
        assert out.shape == ()
        assert jnp.allclose(out, ref, atol=1e-3, rtol=1e-4), (x.shape, out, ref)

    print("KERNEL_OK")
</pallas_src>

<mosaic_0001>
module attributes {stable_mosaic.version = 11 : i64} {
  func.func @kernel(%arg0: i32, %arg1: i32, %arg2: memref<16x128xf32, #tpu.memory_space<vmem>>, %arg3: memref<1x8x128xf32, #tpu.memory_space<vmem>>) attributes {dimension_semantics = [#tpu.dimension_semantics<parallel>, #tpu.dimension_semantics<arbitrary>], iteration_bounds = array<i64: 2, 1>, scalar_prefetch = 0 : i64, scratch_operands = 0 : i64, tpu.core_type = #tpu.core_type<tc>, window_params = [{transform_indices = @transform_0, window_bounds = array<i64: 16, 128>}, {transform_indices = @transform_1, window_bounds = array<i64: 1, 8, 128>}]} {
    %c0_i32 = arith.constant 0 : i32
    %0 = arith.cmpi eq, %arg1, %c0_i32 : i32
    %1 = arith.extui %0 : i1 to i32
    %c0_i32_0 = arith.constant 0 : i32
    %2 = arith.cmpi ne, %1, %c0_i32_0 : i32
    scf.if %2 {
      %cst_10 = arith.constant 0.000000e+00 : f32
      %22 = vector.broadcast %cst_10 : f32 to vector<1x8x128xf32>
      %c0_11 = arith.constant 0 : index
      %c0_12 = arith.constant 0 : index
      %c0_13 = arith.constant 0 : index
      %23 = vector.load %arg3[%c0_11, %c0_12, %c0_13] : memref<1x8x128xf32, #tpu.memory_space<vmem>>, vector<1x8x128xf32>
      tpu.vector_store %arg3[%c0_11, %c0_12, %c0_13], %22 {strides = array<i32>} : memref<1x8x128xf32, #tpu.memory_space<vmem>>, vector<1x8x128xf32>,
    } else {
    }
    %c0 = arith.constant 0 : index
    %c0_1 = arith.constant 0 : index
    %3 = vector.load %arg2[%c0, %c0_1] : memref<16x128xf32, #tpu.memory_space<vmem>>, vector<16x128xf32>
    %c1_i32 = arith.constant 1 : i32
    %4 = arith.muli %arg0, %c1_i32 : i32
    %5 = arith.addi %4, %arg1 : i32
    %c16_i32 = arith.constant 16 : i32
    %6 = arith.muli %5, %c16_i32 : i32
    %7 = tpu.iota {dimensions = array<i32: 0>} : vector<16x128xi32>
    %8 = vector.broadcast %6 : i32 to vector<16x128xi32>
    %9 = arith.addi %8, %7 : vector<16x128xi32>
    %c16_i32_2 = arith.constant 16 : i32
    %10 = vector.broadcast %c16_i32_2 : i32 to vector<16x128xi32>
    %11 = arith.cmpi slt, %9, %10 : vector<16x128xi32>
    %cst = arith.constant 1.000000e+00 : f32
    %12 = vector.broadcast %cst : f32 to vector<16x128xf32>
    %13 = arith.select %11, %3, %12 : vector<16x128xi1>, vector<16x128xf32>
    %14 = math.log %13 : vector<16x128xf32>
    %15 = arith.mulf %13, %14 : vector<16x128xf32>
    %16 = vector.shape_cast %15 : vector<16x128xf32> to vector<2x8x128xf32>
    %cst_3 = arith.constant dense<0.000000e+00> : vector<8x128xf32>
    %17 = vector.multi_reduction <add>, %16, %cst_3 [0] : vector<2x8x128xf32> to vector<8x128xf32>
    %c0_4 = arith.constant 0 : index
    %c0_5 = arith.constant 0 : index
    %c0_6 = arith.constant 0 : index
    %18 = vector.load %arg3[%c0_4, %c0_5, %c0_6] : memref<1x8x128xf32, #tpu.memory_space<vmem>>, vector<1x8x128xf32>
    %19 = vector.shape_cast %17 : vector<8x128xf32> to vector<1x8x128xf32>
    %20 = arith.addf %18, %19 : vector<1x8x128xf32>
    %c0_7 = arith.constant 0 : index
    %c0_8 = arith.constant 0 : index
    %c0_9 = arith.constant 0 : index
    %21 = vector.load %arg3[%c0_7, %c0_8, %c0_9] : memref<1x8x128xf32, #tpu.memory_space<vmem>>, vector<1x8x128xf32>
    tpu.vector_store %arg3[%c0_7, %c0_8, %c0_9], %20 {strides = array<i32>} : memref<1x8x128xf32, #tpu.memory_space<vmem>>, vector<1x8x128xf32>,
    return
  }
  func.func @transform_0(%arg0: i32, %arg1: i32) -> (i32, i32) {
    %c1_i32 = arith.constant 1 : i32
    %0 = arith.muli %arg0, %c1_i32 : i32
    %1 = arith.addi %0, %arg1 : i32
    %c0_i32 = arith.constant 0 : i32
    %2 = arith.minsi %1, %c0_i32 : i32
    %c0_i32_0 = arith.constant 0 : i32
    %c0_i32_1 = arith.constant 0 : i32
    return %2, %c0_i32_0 : i32, i32
  }
  func.func @transform_1(%arg0: i32, %arg1: i32) -> (i32, i32, i32) {
    %c0_i32 = arith.constant 0 : i32
    %c0_i32_0 = arith.constant 0 : i32
    %c0_i32_1 = arith.constant 0 : i32
    return %arg0, %c0_i32, %c0_i32_0 : i32, i32, i32
  }
}

</mosaic_0001>

<llo_original>
// kernel: tpu_custom_call.1
$region0: #{tpu_custom_call.1}
  #allocation0 [shape = 'u32[]', space=smem, size = 0x4, offset = 0x4, fixed_abs, tag = 'smem constant byte address 0x4 - core index']
  #allocation1 [shape = 'u32[72,128]{1,0:T(1,128)}', space=vmem, size = 0x9000, scoped, tag = 'internal scratch']
  %s0 = inlined_call_operand.hbm [shape: f32[16,128], index: 0, kind: input, shape index: {}]
  %s1 = inlined_call_operand.hbm [shape: f32[2,8,128], index: 1, kind: output, shape index: {}]
  %s2 = sld [smem:[#allocation0]]
  $region45: #{tpu_custom_call.1} parent=0
    _
  %s4 = ssub.s32 1, %s2
  %s5 = scalar_select 0, %s4, %s2
  $region1: #{tpu_custom_call.1} parent=0
    #allocation2 [shape = 'u8[16384]{0}', space=vmem, size = 0x4000, scoped, tag = 'input window, operand 0']
    #allocation3 [shape = 's32[2]{0}', space=sflag, size = 0x8, scoped, tag = 'scoped memory for tpu_custom_call.1']
    #allocation4 [shape = 's32[2]{0}', space=sflag, size = 0x8, scoped, tag = 'scoped memory for tpu_custom_call.1']
    #allocation5 [shape = 'u8[8192]{0}', space=vmem, size = 0x2000, scoped, tag = 'output window, operand 0']
    %6 = vsyncpa [#allocation3], 0
    %s7 = scalar_lea.sflag [#allocation3], 1
    %8 = vsyncpa %s7, 0
    %9 = vsyncpa [#allocation4], 0
    %s10 = scalar_lea.sflag [#allocation4], 1
    %11 = vsyncpa %s10, 0
    loop: start=0, step=1, limit=4
    $region2: #{tpu_custom_call.1} parent=1 // loop_pre_header
      _
    $region3: #{tpu_custom_call.1} parent=1 // loop_header
      %s13 = sphi 0, %s17
      %p14 = scmp.ge.s32.totalorder %s13, 4
      %s20 = sphi 0, %s32
      %s21 = sphi 0, %s28
      %s22 = sphi 0, %s20
      %s23 = sphi 0, %s21
      %s24 = sphi 0, %s22
      %s25 = sphi 0, %s23
      %s41 = sphi 0, %s43
      %s44 = sphi 0, %s41
      %s45 = sphi 0, %s44
      %s61 = sphi 0, %s45
      %s67 = sphi 0, %s69
      %s70 = sphi 0, %s67
      %s71 = sphi 0, %s70
      %s87 = sphi 0, %s71
    $region4: #{tpu_custom_call.1} parent=1 // loop_header_branch
      %16 = sbr.rel (%p14) target = $region8
    $region5: #{tpu_custom_call.1} parent=1 // loop_body
      %s18 = ssub.s32 %s13, 1
      %s19 = ssub.s32 %s13, 2
      %s26 = sadd.s32 1, %s21
      %p27 = scmp.ge.s32.totalorder %s26, 1
      %s28 = scalar_select %p27, 0, %s26
      %s29 = sadd.s32 1, %s20
      %s30 = scalar_select %p27, %s29, %s20
      %p31 = scmp.ge.s32.totalorder %s30, 2
      %s32 = scalar_select %p31, 0, %s30
      %s33 = sadd.s32 %s20, %s21
      %p34 = scmp.lt.s32.totalorder %s33, 0
      %s35 = scalar_select %p34, %s33, 0
      %s36 = sadd.s32 %s32, %s28
      %p37 = scmp.lt.s32.totalorder %s36, 0
      %s38 = scalar_select %p37, %s36, 0
      %s39 = ssub.s32 %s35, %s38
      %p40 = scmp.eq.s32.totalorder %s39, 0
      %s42 = sadd.s32 %s41, 1
      %s43 = scalar_select %p40, %s41, %s42
      %p46 = pneg %p40
      %p47 = scmp.eq.s32.totalorder %s13, 1
      %p48 = por %p46, %p47
      %p49 = scmp.ne.s32.totalorder %s41, %s44
      %p50 = scmp.eq.s32.totalorder %s13, 0
      %p51 = por %p49, %p50
      %p52 = scmp.ne.s32.totalorder %s41, %s44
      %p53 = scmp.eq.s32.totalorder %s18, 1
      %p54 = por %p52, %p53
      %p55 = scmp.ne.s32.totalorder %s44, %s45
      %p56 = scmp.eq.s32.totalorder %s18, 0
      %p57 = por %p55, %p56
      %p58 = scmp.ne.s32.totalorder %s44, %s45
      %p59 = scmp.eq.s32.totalorder %s19, 1
      %p60 = por %p58, %p59
      %p62 = scmp.ne.s32.totalorder %s45, %s61
      %p63 = scmp.eq.s32.totalorder %s19, 0
      %p64 = por %p62, %p63
      %s65 = ssub.s32 %s20, %s32
      %p66 = scmp.eq.s32.totalorder %s65, 0
      %s68 = sadd.s32 %s67, 1
      %s69 = scalar_select %p66, %s67, %s68
      %p72 = pneg %p66
      %p73 = scmp.eq.s32.totalorder %s13, 1
      %p74 = por %p72, %p73
      %p75 = scmp.ne.s32.totalorder %s67, %s70
      %p76 = scmp.eq.s32.totalorder %s13, 0
      %p77 = por %p75, %p76
      %p78 = scmp.ne.s32.totalorder %s67, %s70
      %p79 = scmp.eq.s32.totalorder %s18, 1
      %p80 = por %p78, %p79
      %p81 = scmp.ne.s32.totalorder %s70, %s71
      %p82 = scmp.eq.s32.totalorder %s18, 0
      %p83 = por %p81, %p82
      %p84 = scmp.ne.s32.totalorder %s70, %s71
      %p85 = scmp.eq.s32.totalorder %s19, 1
      %p86 = por %p84, %p85
      %p88 = scmp.ne.s32.totalorder %s71, %s87
      %p89 = scmp.eq.s32.totalorder %s19, 0
      %p90 = por %p88, %p89
      %p91 = scmp.le.s32.totalorder 1, %s13
      %p92 = scmp.lt.s32.totalorder %s13, 3
      %p93 = pnand %p91, %p92
      %p94 = pneg %p93
      // Predicated region
      $region9: #{tpu_custom_call.1} parent=5 // pred_check
        _
      $region10: #{tpu_custom_call.1} parent=5 // pred_check_branch
        %96 = sbr.rel (%p93) target = $region12
      $region11: #{tpu_custom_call.1} parent=5 // pred_region
        %s97 = ssub.s32 %s13, 1
      $region12: #{tpu_custom_call.1} parent=5 // pred_fallthru
        _
      %p98 = scmp.lt.s32.totalorder %s13, 2
      // Predicated region
      $region13: #{tpu_custom_call.1} parent=5 // pred_check
        %p99 = pneg %p98
      $region14: #{tpu_custom_call.1} parent=5 // pred_check_branch
        %101 = sbr.rel (%p99) target = $region16
      $region15: #{tpu_custom_call.1} parent=5 // pred_region
        // Predicated region
        $region17: #{tpu_custom_call.1} parent=15 // pred_check
          %p102 = pneg %p51
        $region18: #{tpu_custom_call.1} parent=15 // pred_check_branch
          %104 = sbr.rel (%p102) target = $region20
        $region19: #{tpu_custom_call.1} parent=15 // pred_region
          %s105 = sand.u32 %s41, 1
          %s106 = scalar_lea.sflag [#allocation3], %s105
          %s107 = sand.u32 %s41, 1
          %s108 = smul.addr %s107, 16
          %s109 = scalar_lea.vmem [#allocation2], %s108
          %s110 = sadd.s32 %s20, %s21
          %p111 = scmp.lt.s32.totalorder %s110, 0
          %s112 = scalar_select %p111, %s110, 0
          %s113 = smul.u32 2, %s112
          %115 = vsyncadd %s106, 0
          %s116 = smul.addr %s113, 8
          %s117 = scalar_lea.hbm %s0, %s116
          %s118 = sshll.u32 %s117, 4
          %s119 = int_to_ptr.hbm [resolvable:$true] %s118
          %s120 = sshll.u32 %s109, 4
          %s121 = int_to_ptr.vmem [resolvable:$true] %s120
          %126 = dma.hbm_to_vmem [thread:$0]  %s119, 256, %s121, %s106, 128, 128, 8
        $region20: #{tpu_custom_call.1} parent=15 // pred_fallthru
          _
      $region16: #{tpu_custom_call.1} parent=5 // pred_fallthru
        _
      %p127 = scmp.le.s32.totalorder 1, %s13
      %p128 = scmp.lt.s32.totalorder %s13, 3
      %p129 = pnand %p127, %p128
      %p130 = pneg %p129
      // Predicated region
      $region21: #{tpu_custom_call.1} parent=5 // pred_check
        _
      $region22: #{tpu_custom_call.1} parent=5 // pred_check_branch
        %132 = sbr.rel (%p129) target = $region24
      $region23: #{tpu_custom_call.1} parent=5 // pred_region
        %s133 = ssub.s32 %s13, 1
        %s134 = sand.u32 %s44, 1
        %s135 = scalar_lea.sflag [#allocation3], %s134
        %s136 = sand.u32 %s44, 1
        %s137 = smul.addr %s136, 16
        %s138 = scalar_lea.vmem [#allocation2], %s137
        // Predicated region
        $region25: #{tpu_custom_call.1} parent=23 // pred_check
          %p139 = pneg %p57
        $region26: #{tpu_custom_call.1} parent=23 // pred_check_branch
          %141 = sbr.rel (%p139) target = $region28
        $region27: #{tpu_custom_call.1} parent=23 // pred_region
          %143 = dma.done %s135, 256
        $region28: #{tpu_custom_call.1} parent=23 // pred_fallthru
          _
        %s144 = sand.u32 %s44, 1
        %s145 = scalar_lea.sflag [#allocation3], %s144
        %s146 = sand.u32 %s44, 1
        %s147 = smul.addr %s146, 16
        %s148 = scalar_lea.vmem [#allocation2], %s147
        %p149 = pneg %p57
        %p150 = pneg %p54
        %p151 = pneg %p83
        %p152 = pneg %p80
        %s153 = sand.u32 %s70, 1
        %s154 = scalar_lea.sflag [#allocation4], %s153
        %s155 = sand.u32 %s70, 1
        %s156 = smul.addr %s155, 8
        %s157 = scalar_lea.vmem [#allocation5], %s156
        %s158 = sadd.s32 %s22, %s23
        %p159 = scmp.lt.s32.totalorder %s158, 0
        %s160 = scalar_select %p159, %s158, 0
        %s161 = smul.u32 2, %s160
        %p162 = scmp.eq.s32.totalorder %s23, 0
        // Predicated region
        $region29: #{tpu_custom_call.1} parent=23 // pred_check
          %p163 = pneg %p162
        $region30: #{tpu_custom_call.1} parent=23 // pred_check_branch
          %165 = sbr.rel (%p163) target = $region32
        $region31: #{tpu_custom_call.1} parent=23 // pred_region
          %166 = vst [vmem:[%s157] sm:$0xff] 0.0
        $region32: #{tpu_custom_call.1} parent=23 // pred_fallthru
          _
        %v167 = vld [vmem:[%s138] sm:$0xff]
        %v168 = vld [vmem:[%s138 + $0x8] sm:$0xff]
        %s169 = sadd.s32 %s22, %s23
        %s170 = smul.u32 %s169, 16
        %v171 = vlaneseq
        %v172 = vshrl.u32 %v171, 7
        %v173 = vadd.s32 %v172, 8
        %v174 = vstv %s170
        %v175 = vadd.s32 %v174, %v172
        %v176 = vadd.s32 %v174, %v173
        %vm177 = vcmp.lt.s32.totalorder %v175, 16
        %vm178 = vcmp.lt.s32.totalorder %v176, 16
        %v179 = vsel %vm177, %v167, 1.0
        %v180 = vsel %vm178, %v168, 1.0
        %v181 = vlog2.pop %v179
        %v182 = vmul.f32 %v181, 0.6931472
        %v183 = vlog2.pop %v180
        %v184 = vmul.f32 %v183, 0.6931472
        %v185 = vmul.f32 %v179, %v182
        %v186 = vmul.f32 %v180, %v184
        %v187 = vadd.f32 %v185, %v186
        %v188 = vld [vmem:[%s157] sm:$0xff]
        %v189 = vadd.f32 %v188, %v187
        %190 = vst [vmem:[%s157] sm:$0xff] %v189
        %s191 = sand.u32 %s70, 1
        %s192 = scalar_lea.sflag [#allocation4], %s191
        %s193 = sand.u32 %s70, 1
        %s194 = smul.addr %s193, 8
        %s195 = scalar_lea.vmem [#allocation5], %s194
        // Predicated region
        $region33: #{tpu_custom_call.1} parent=23 // pred_check
          %p196 = pneg %p80
        $region34: #{tpu_custom_call.1} parent=23 // pred_check_branch
          %198 = sbr.rel (%p196) target = $region36
        $region35: #{tpu_custom_call.1} parent=23 // pred_region
          %200 = vsyncadd %s192, 0
          %s201 = smul.addr %s22, 8
          %s202 = scalar_lea.hbm %s1, %s201
          %s204 = sshll.u32 %s195, 4
          %s205 = int_to_ptr.vmem [resolvable:$true] %s204
          %s206 = sshll.u32 %s202, 4
          %s207 = int_to_ptr.hbm [resolvable:$true] %s206
          %209 = dma.vmem_to_hbm [thread:$0]  %s205, 128, %s207, %s192
        $region36: #{tpu_custom_call.1} parent=23 // pred_fallthru
          _
      $region24: #{tpu_custom_call.1} parent=5 // pred_fallthru
        _
      %p210 = scmp.le.s32.totalorder 2, %s13
      // Predicated region
      $region37: #{tpu_custom_call.1} parent=5 // pred_check
        %p211 = pneg %p210
      $region38: #{tpu_custom_call.1} parent=5 // pred_check_branch
        %213 = sbr.rel (%p211) target = $region40
      $region39: #{tpu_custom_call.1} parent=5 // pred_region
        %s214 = ssub.s32 %s13, 2
        // Predicated region
        $region41: #{tpu_custom_call.1} parent=39 // pred_check
          %p215 = pneg %p86
        $region42: #{tpu_custom_call.1} parent=39 // pred_check_branch
          %217 = sbr.rel (%p215) target = $region44
        $region43: #{tpu_custom_call.1} parent=39 // pred_region
          %s218 = sand.u32 %s71, 1
          %s219 = scalar_lea.sflag [#allocation4], %s218
          %s220 = sand.u32 %s71, 1
          %s221 = smul.addr %s220, 8
          %s222 = scalar_lea.vmem [#allocation5], %s221
          %224 = dma.done %s219, 128
        $region44: #{tpu_custom_call.1} parent=39 // pred_fallthru
          _
      $region40: #{tpu_custom_call.1} parent=5 // pred_fallthru
        _
    $region6: #{tpu_custom_call.1} parent=1 // loop_footer
      %s17 = sadd.s32 1, %s13
    $region7: #{tpu_custom_call.1} parent=1 // loop_footer_branch
      %12 = sbr.rel target = $region3
    $region8: #{tpu_custom_call.1} parent=1 // loop_exit
      _
    %225 = vsyncpa [#allocation3], 1
    %s226 = scalar_lea.sflag [#allocation3], 1
    %227 = vsyncpa %s226, 1
    %228 = vsyncpa [#allocation4], 1
    %s229 = scalar_lea.sflag [#allocation4], 1
    %230 = vsyncpa %s229, 1

</llo_original>
